<compile_context>
chip_gen: v7x
topology: tpu7x:2x2x1
jax: 0.10.0
libtpu: 0.0.40
codegen_flags: <defaults>
</compile_context>

<pallas_src>
import functools

import jax
import jax.numpy as jnp
from jax import lax
from jax.experimental import pallas as pl
from jax.experimental.pallas import tpu as pltpu


def _attention_kernel(*refs, num_heads, head_dim, scale, has_mask, approx_recip):
    """One batch element per grid step.

    refs (has_mask=True):
      x_ref     : (1, N, C)        compute dtype (bf16 or f32)
      mask_ref  : (1, N, N)        f32 additive attention mask
      wqkv_ref  : (H, C, 3*hd)     compute dtype, head-major QKV weights
      bqkv_ref  : (H, 1, 3*hd)     f32, head-major (q_bias | 0 | v_bias)
      wproj_ref : (H, hd, C)       compute dtype, head-major proj weights
      bproj_ref : (1, C)           f32 proj bias
      o_ref     : (1, N, C)        output (original x dtype)
      acc_ref   : (N, C)           f32 VMEM scratch accumulator
    """
    if has_mask:
        (x_ref, mask_ref, wqkv_ref, bqkv_ref, wproj_ref, bproj_ref,
         o_ref, acc_ref) = refs
    else:
        (x_ref, wqkv_ref, bqkv_ref, wproj_ref, bproj_ref,
         o_ref, acc_ref) = refs
        mask_ref = None

    cdt = x_ref.dtype  # compute dtype

    # Initialize the f32 output accumulator with the projection bias.
    acc_ref[...] = jnp.broadcast_to(
        bproj_ref[...].astype(jnp.float32), acc_ref.shape)

    @pl.loop(0, num_heads)
    def _per_head(h):
        x = x_ref[0]                                   # (N, C)
        w_h = wqkv_ref[h]                              # (C, 3*hd)
        b_h = bqkv_ref[h]                              # (1, 3*hd) f32

        # Per-head QKV projection: full-depth C contraction on the MXU,
        # f32 accumulation, f32 bias add.
        qkv_h = jnp.dot(x, w_h, preferred_element_type=jnp.float32) + b_h

        q = (qkv_h[:, 0:head_dim] * scale).astype(cdt)           # (N, hd)
        k = qkv_h[:, head_dim:2 * head_dim].astype(cdt)          # (N, hd)
        v = qkv_h[:, 2 * head_dim:3 * head_dim].astype(cdt)      # (N, hd)

        # q @ k^T without materializing a transpose: contract last dims.
        attn = lax.dot_general(
            q, k, (((1,), (1,)), ((), ())),
            preferred_element_type=jnp.float32)                  # (N, N) f32
        if has_mask:
            attn = attn + mask_ref[0]

        # Numerically stable softmax in f32.
        m = jnp.max(attn, axis=-1, keepdims=True)
        e = jnp.exp(attn - m)
        s = jnp.sum(e, axis=-1, keepdims=True)
        if approx_recip:
            p = e * pl.reciprocal(s, approx=True)   # EUP slot, ~free
        else:
            p = e / s                               # exact (f32 path)

        head_out = jnp.dot(p.astype(cdt), v,
                           preferred_element_type=jnp.float32)   # (N, hd)

        # Fold this head's slice of the output projection into the accumulator.
        acc_ref[...] += jnp.dot(head_out.astype(cdt), wproj_ref[h],
                                preferred_element_type=jnp.float32)  # (N, C)

    o_ref[0] = acc_ref[...].astype(o_ref.dtype)


def attention_forward(x, w_qkv, q_bias, v_bias, w_proj, b_proj, num_heads,
                      mask=None, qk_scale=None, compute_dtype=jnp.bfloat16):
    """Pallas equivalent of Attention.forward.

    x      : (B, N, C)
    w_qkv  : (3*all_head_dim, C)   (PyTorch layout)
    q_bias : (all_head_dim,) or None
    v_bias : (all_head_dim,) or None
    w_proj : (C, all_head_dim)     (PyTorch layout)
    b_proj : (C,)
    mask   : (B, N, N) or None (added to attention logits, broadcast over heads)
    """
    B, N, C = x.shape
    all_head_dim = w_qkv.shape[0] // 3
    head_dim = all_head_dim // num_heads
    H = num_heads
    scale = float(qk_scale) if qk_scale is not None else head_dim ** (-0.5)

    # qkv bias: concat(q_bias, zeros_like(v_bias), v_bias), exactly as PyTorch.
    if q_bias is not None:
        bqkv = jnp.concatenate(
            [q_bias, jnp.zeros_like(v_bias), v_bias]).astype(jnp.float32)
    else:
        bqkv = jnp.zeros((3 * all_head_dim,), jnp.float32)

    # Head-major weight layouts so the kernel indexes one head per loop step
    # along the leading axis of a VMEM ref (no unaligned lane slicing).
    #   wqkv_heads[h, c, s*hd + d] = w_qkv[s*D + h*hd + d, c]
    wqkv_heads = (jnp.asarray(w_qkv, jnp.float32)
                  .reshape(3, H, head_dim, C)
                  .transpose(1, 3, 0, 2)
                  .reshape(H, C, 3 * head_dim)
                  .astype(compute_dtype))
    bqkv_heads = (bqkv.reshape(3, H, head_dim)
                  .transpose(1, 0, 2)
                  .reshape(H, 1, 3 * head_dim))
    #   wproj_heads[h, d, c] = w_proj[c, h*hd + d]
    wproj_heads = (jnp.asarray(w_proj, jnp.float32)
                   .reshape(C, H, head_dim)
                   .transpose(1, 2, 0)
                   .astype(compute_dtype))
    bproj = jnp.asarray(b_proj, jnp.float32).reshape(1, C)

    x_c = x.astype(compute_dtype)
    has_mask = mask is not None
    approx_recip = jnp.dtype(compute_dtype) == jnp.dtype(jnp.bfloat16)

    kernel = functools.partial(
        _attention_kernel, num_heads=H, head_dim=head_dim, scale=scale,
        has_mask=has_mask, approx_recip=approx_recip)

    in_specs = [pl.BlockSpec((1, N, C), lambda b: (b, 0, 0))]
    args = [x_c]
    if has_mask:
        # Only DMA a mask when one actually exists (no fake zeros traffic).
        in_specs.append(pl.BlockSpec((1, N, N), lambda b: (b, 0, 0)))
        args.append(mask.astype(jnp.float32))
    in_specs += [
        pl.BlockSpec((H, C, 3 * head_dim), lambda b: (0, 0, 0)),
        pl.BlockSpec((H, 1, 3 * head_dim), lambda b: (0, 0, 0)),
        pl.BlockSpec((H, head_dim, C), lambda b: (0, 0, 0)),
        pl.BlockSpec((1, C), lambda b: (0, 0)),
    ]
    args += [wqkv_heads, bqkv_heads, wproj_heads, bproj]

    # Advisory cost estimate so XLA schedules around the call sensibly.
    flops = 2 * B * N * (C * 3 * all_head_dim        # qkv projection
                         + 2 * N * all_head_dim      # qk^T and p@v
                         + all_head_dim * C)         # output projection
    bytes_accessed = (sum(int(a.size) * a.dtype.itemsize for a in args)
                      + B * N * C * jnp.dtype(x.dtype).itemsize)
    cost = pl.CostEstimate(flops=flops,
                           transcendentals=B * H * N * N,
                           bytes_accessed=bytes_accessed)

    return pl.pallas_call(
        kernel,
        out_shape=jax.ShapeDtypeStruct((B, N, C), x.dtype),
        grid_spec=pltpu.PrefetchScalarGridSpec(
            num_scalar_prefetch=0,
            grid=(B,),
            in_specs=in_specs,
            out_specs=pl.BlockSpec((1, N, C), lambda b: (b, 0, 0)),
            scratch_shapes=[pltpu.VMEM((N, C), jnp.float32)],
        ),
        compiler_params=pltpu.CompilerParams(
            dimension_semantics=("parallel",),
            vmem_limit_bytes=64 * 1024 * 1024),
        cost_estimate=cost,
    )(*args)


def _reference_attention(x, w_qkv, q_bias, v_bias, w_proj, b_proj,
                         num_heads, mask=None, qk_scale=None):
    """Pure-JAX reference matching the PyTorch forward line-by-line."""
    B, N, C = x.shape
    all_head_dim = w_qkv.shape[0] // 3
    head_dim = all_head_dim // num_heads
    scale = qk_scale if qk_scale is not None else head_dim ** (-0.5)

    if q_bias is not None:
        bias = jnp.concatenate([q_bias, jnp.zeros_like(v_bias), v_bias])
    else:
        bias = jnp.zeros((3 * all_head_dim,), x.dtype)

    qkv = x @ w_qkv.T + bias
    qkv = qkv.reshape(B, N, 3, num_heads, -1).transpose(2, 0, 3, 1, 4)
    q, k, v = qkv[0], qkv[1], qkv[2]
    q = q * scale
    attn = q @ jnp.swapaxes(k, -2, -1)
    if mask is not None:
        attn = attn + mask[:, None]
    attn = jax.nn.softmax(attn, axis=-1)
    out = (attn @ v).transpose(0, 2, 1, 3).reshape(B, N, -1)
    return out @ w_proj.T + b_proj


if __name__ == "__main__":
    # Small, module-consistent shapes: B=2, seq N=8, dim C=32, 4 heads (hd=8).
    B, N, C = 2, 8, 32
    num_heads = 4
    head_dim = C // num_heads
    all_head_dim = head_dim * num_heads

    key = jax.random.PRNGKey(0)
    kx, kw1, kw2, kb1, kb2, kb3, km = jax.random.split(key, 7)

    x = jax.random.normal(kx, (B, N, C), jnp.float32)
    w_qkv = jax.random.normal(kw1, (3 * all_head_dim, C), jnp.float32) * 0.1
    q_bias = jax.random.normal(kb1, (all_head_dim,), jnp.float32) * 0.1
    v_bias = jax.random.normal(kb2, (all_head_dim,), jnp.float32) * 0.1
    w_proj = jax.random.normal(kw2, (C, all_head_dim), jnp.float32) * 0.1
    b_proj = jax.random.normal(kb3, (C,), jnp.float32) * 0.1
    mask = jax.random.normal(km, (B, N, N), jnp.float32)  # additive attn mask

    ref_mask = _reference_attention(x, w_qkv, q_bias, v_bias, w_proj, b_proj,
                                    num_heads, mask=mask)
    ref_nomask = _reference_attention(x, w_qkv, q_bias, v_bias, w_proj, b_proj,
                                      num_heads, mask=None)

    # f32 compute path (exact divide): tight tolerance, mask and no-mask variants.
    out_f32 = attention_forward(x, w_qkv, q_bias, v_bias, w_proj, b_proj,
                                num_heads, mask=mask,
                                compute_dtype=jnp.float32)
    out_f32_nm = attention_forward(x, w_qkv, q_bias, v_bias, w_proj, b_proj,
                                   num_heads, mask=None,
                                   compute_dtype=jnp.float32)
    jax.block_until_ready(out_f32)
    jax.block_until_ready(out_f32_nm)
    assert jnp.allclose(out_f32, ref_mask, atol=1e-5, rtol=1e-5), \
        "mismatch (f32, mask)"
    assert jnp.allclose(out_f32_nm, ref_nomask, atol=1e-5, rtol=1e-5), \
        "mismatch (f32, no mask)"

    # bf16 compute path (dense MXU packing, f32 accumulation): loose tolerance.
    out_bf16 = attention_forward(x, w_qkv, q_bias, v_bias, w_proj, b_proj,
                                 num_heads, mask=mask,
                                 compute_dtype=jnp.bfloat16)
    jax.block_until_ready(out_bf16)
    assert jnp.allclose(out_bf16.astype(jnp.float32), ref_mask,
                        atol=5e-2, rtol=5e-2), "mismatch (bf16, mask)"

    print("KERNEL_OK")
</pallas_src>

<mosaic_0001>
module attributes {stable_mosaic.version = 11 : i64} {
  func.func @_attention_kernel(%arg0: i32, %arg1: memref<1x8x32xf32, #tpu.memory_space<vmem>>, %arg2: memref<1x8x8xf32, #tpu.memory_space<vmem>>, %arg3: memref<4x32x24xf32, #tpu.memory_space<vmem>>, %arg4: memref<4x1x24xf32, #tpu.memory_space<vmem>>, %arg5: memref<4x8x32xf32, #tpu.memory_space<vmem>>, %arg6: memref<1x32xf32, #tpu.memory_space<vmem>>, %arg7: memref<1x8x32xf32, #tpu.memory_space<vmem>>, %arg8: memref<8x32xf32, #tpu.memory_space<vmem>>) attributes {dimension_semantics = [#tpu.dimension_semantics<parallel>], iteration_bounds = array<i64: 2>, scalar_prefetch = 0 : i64, scratch_operands = 1 : i64, tpu.core_type = #tpu.core_type<tc>, window_params = [{transform_indices = @transform_0, window_bounds = array<i64: 1, 8, 32>}, {transform_indices = @transform_1, window_bounds = array<i64: 1, 8, 8>}, {pipeline_mode = #tpu.pipeline_mode<synchronous>, transform_indices = @transform_2, window_bounds = array<i64: 4, 32, 24>}, {pipeline_mode = #tpu.pipeline_mode<synchronous>, transform_indices = @transform_3, window_bounds = array<i64: 4, 1, 24>}, {pipeline_mode = #tpu.pipeline_mode<synchronous>, transform_indices = @transform_4, window_bounds = array<i64: 4, 8, 32>}, {pipeline_mode = #tpu.pipeline_mode<synchronous>, transform_indices = @transform_5, window_bounds = array<i64: 1, 32>}, {transform_indices = @transform_6, window_bounds = array<i64: 1, 8, 32>}]} {
    %c0 = arith.constant 0 : index
    %c0_0 = arith.constant 0 : index
    %0 = vector.load %arg6[%c0, %c0_0] : memref<1x32xf32, #tpu.memory_space<vmem>>, vector<1x32xf32>
    %1 = vector.shape_cast %0 : vector<1x32xf32> to vector<1x32xf32>
    %2 = vector.broadcast %1 : vector<1x32xf32> to vector<8x32xf32>
    %c0_1 = arith.constant 0 : index
    %c0_2 = arith.constant 0 : index
    %3 = vector.load %arg8[%c0_1, %c0_2] : memref<8x32xf32, #tpu.memory_space<vmem>>, vector<8x32xf32>
    tpu.vector_store %arg8[%c0_1, %c0_2], %2 {strides = array<i32>} : memref<8x32xf32, #tpu.memory_space<vmem>>, vector<8x32xf32>,
    %c0_i32 = arith.constant 0 : i32
    %c4_i32 = arith.constant 4 : i32
    %4 = arith.addi %c0_i32, %c4_i32 : i32
    %c1_i32 = arith.constant 1 : i32
    scf.for %arg9 = %c0_i32 to %4 step %c1_i32  : i32 {
      %c1_i32_9 = arith.constant 1 : i32
      %9 = arith.muli %arg9, %c1_i32_9 : i32
      %c0_i32_10 = arith.constant 0 : i32
      %10 = arith.addi %c0_i32_10, %9 : i32
      %c0_11 = arith.constant 0 : index
      %c0_12 = arith.constant 0 : index
      %c0_13 = arith.constant 0 : index
      %11 = vector.load %arg1[%c0_11, %c0_12, %c0_13] : memref<1x8x32xf32, #tpu.memory_space<vmem>>, vector<1x8x32xf32>
      %12 = vector.shape_cast %11 : vector<1x8x32xf32> to vector<8x32xf32>
      %13 = arith.index_cast %10 : i32 to index
      %c0_14 = arith.constant 0 : index
      %c0_15 = arith.constant 0 : index
      %14 = vector.load %arg3[%13, %c0_14, %c0_15] : memref<4x32x24xf32, #tpu.memory_space<vmem>>, vector<1x32x24xf32>
      %15 = vector.shape_cast %14 : vector<1x32x24xf32> to vector<32x24xf32>
      %16 = arith.index_cast %10 : i32 to index
      %c0_16 = arith.constant 0 : index
      %c0_17 = arith.constant 0 : index
      %17 = vector.load %arg4[%16, %c0_16, %c0_17] : memref<4x1x24xf32, #tpu.memory_space<vmem>>, vector<1x1x24xf32>
      %18 = vector.shape_cast %17 : vector<1x1x24xf32> to vector<1x24xf32>
      %cst = arith.constant dense<0.000000e+00> : vector<8x24xf32>
      %19 = tpu.matmul %12, %15, %cst {dimension_numbers = #tpu.dot_dimension_numbers<[1], [0], [0], [1], [0, 0, 1, 1], [], []>} : vector<8x32xf32>, vector<32x24xf32>, vector<8x24xf32> -> vector<8x24xf32>
      %20 = vector.broadcast %18 : vector<1x24xf32> to vector<8x24xf32>
      %21 = arith.addf %19, %20 : vector<8x24xf32>
      %22 = vector.extract_strided_slice %21 {offsets = [0, 0], sizes = [8, 8], strides = [1, 1]} : vector<8x24xf32> to vector<8x8xf32>
      %cst_18 = arith.constant 0.353553385 : f32
      %23 = vector.broadcast %cst_18 : f32 to vector<8x8xf32>
      %24 = arith.mulf %22, %23 : vector<8x8xf32>
      %25 = vector.extract_strided_slice %21 {offsets = [0, 8], sizes = [8, 8], strides = [1, 1]} : vector<8x24xf32> to vector<8x8xf32>
      %26 = vector.extract_strided_slice %21 {offsets = [0, 16], sizes = [8, 8], strides = [1, 1]} : vector<8x24xf32> to vector<8x8xf32>
      %cst_19 = arith.constant dense<0.000000e+00> : vector<8x8xf32>
      %27 = tpu.matmul %24, %25, %cst_19 {dimension_numbers = #tpu.dot_dimension_numbers<[1], [1], [0], [0], [0, 0, 1, 0], [], []>} : vector<8x8xf32>, vector<8x8xf32>, vector<8x8xf32> -> vector<8x8xf32>
      %c0_20 = arith.constant 0 : index
      %c0_21 = arith.constant 0 : index
      %c0_22 = arith.constant 0 : index
      %28 = vector.load %arg2[%c0_20, %c0_21, %c0_22] : memref<1x8x8xf32, #tpu.memory_space<vmem>>, vector<1x8x8xf32>
      %29 = vector.shape_cast %28 : vector<1x8x8xf32> to vector<8x8xf32>
      %30 = arith.addf %27, %29 : vector<8x8xf32>
      %cst_23 = arith.constant dense<0xFF800000> : vector<8xf32>
      %31 = vector.multi_reduction <maximumf>, %30, %cst_23 [1] : vector<8x8xf32> to vector<8xf32>
      %32 = vector.shape_cast %31 : vector<8xf32> to vector<8x1xf32>
      %33 = vector.broadcast %32 : vector<8x1xf32> to vector<8x8xf32>
      %34 = arith.subf %30, %33 : vector<8x8xf32>
      %35 = math.exp %34 : vector<8x8xf32>
      %cst_24 = arith.constant dense<0.000000e+00> : vector<8xf32>
      %36 = vector.multi_reduction <add>, %35, %cst_24 [1] : vector<8x8xf32> to vector<8xf32>
      %37 = vector.shape_cast %36 : vector<8xf32> to vector<8x1xf32>
      %38 = vector.broadcast %37 : vector<8x1xf32> to vector<8x8xf32>
      %39 = arith.divf %35, %38 : vector<8x8xf32>
      %cst_25 = arith.constant dense<0.000000e+00> : vector<8x8xf32>
      %40 = tpu.matmul %39, %26, %cst_25 {dimension_numbers = #tpu.dot_dimension_numbers<[1], [0], [0], [1], [0, 0, 1, 1], [], []>} : vector<8x8xf32>, vector<8x8xf32>, vector<8x8xf32> -> vector<8x8xf32>
      %c0_26 = arith.constant 0 : index
      %c0_27 = arith.constant 0 : index
      %41 = vector.load %arg8[%c0_26, %c0_27] : memref<8x32xf32, #tpu.memory_space<vmem>>, vector<8x32xf32>
      %42 = arith.index_cast %10 : i32 to index
      %c0_28 = arith.constant 0 : index
      %c0_29 = arith.constant 0 : index
      %43 = vector.load %arg5[%42, %c0_28, %c0_29] : memref<4x8x32xf32, #tpu.memory_space<vmem>>, vector<1x8x32xf32>
      %44 = vector.shape_cast %43 : vector<1x8x32xf32> to vector<8x32xf32>
      %cst_30 = arith.constant dense<0.000000e+00> : vector<8x32xf32>
      %45 = tpu.matmul %40, %44, %cst_30 {dimension_numbers = #tpu.dot_dimension_numbers<[1], [0], [0], [1], [0, 0, 1, 1], [], []>} : vector<8x8xf32>, vector<8x32xf32>, vector<8x32xf32> -> vector<8x32xf32>
      %46 = arith.addf %41, %45 : vector<8x32xf32>
      %c0_31 = arith.constant 0 : index
      %c0_32 = arith.constant 0 : index
      %47 = vector.load %arg8[%c0_31, %c0_32] : memref<8x32xf32, #tpu.memory_space<vmem>>, vector<8x32xf32>
      tpu.vector_store %arg8[%c0_31, %c0_32], %46 {strides = array<i32>} : memref<8x32xf32, #tpu.memory_space<vmem>>, vector<8x32xf32>,
    }
    %c4_i32_3 = arith.constant 4 : i32
    %c0_4 = arith.constant 0 : index
    %c0_5 = arith.constant 0 : index
    %5 = vector.load %arg8[%c0_4, %c0_5] : memref<8x32xf32, #tpu.memory_space<vmem>>, vector<8x32xf32>
    %c0_6 = arith.constant 0 : index
    %c0_7 = arith.constant 0 : index
    %c0_8 = arith.constant 0 : index
    %6 = vector.load %arg7[%c0_6, %c0_7, %c0_8] : memref<1x8x32xf32, #tpu.memory_space<vmem>>, vector<1x8x32xf32>
    %7 = vector.shape_cast %6 : vector<1x8x32xf32> to vector<8x32xf32>
    %8 = vector.shape_cast %5 : vector<8x32xf32> to vector<1x8x32xf32>
    tpu.vector_store %arg7[%c0_6, %c0_7, %c0_8], %8 {strides = array<i32>} : memref<1x8x32xf32, #tpu.memory_space<vmem>>, vector<1x8x32xf32>,
    return
  }
  func.func @transform_0(%arg0: i32) -> (i32, i32, i32) {
    %c0_i32 = arith.constant 0 : i32
    %c0_i32_0 = arith.constant 0 : i32
    %c0_i32_1 = arith.constant 0 : i32
    return %arg0, %c0_i32, %c0_i32_0 : i32, i32, i32
  }
  func.func @transform_1(%arg0: i32) -> (i32, i32, i32) {
    %c0_i32 = arith.constant 0 : i32
    %c0_i32_0 = arith.constant 0 : i32
    %c0_i32_1 = arith.constant 0 : i32
    return %arg0, %c0_i32, %c0_i32_0 : i32, i32, i32
  }
  func.func @transform_2(%arg0: i32) -> (i32, i32, i32) {
    %c0_i32 = arith.constant 0 : i32
    %c0_i32_0 = arith.constant 0 : i32
    %c0_i32_1 = arith.constant 0 : i32
    %c0_i32_2 = arith.constant 0 : i32
    return %c0_i32, %c0_i32_0, %c0_i32_1 : i32, i32, i32
  }
  func.func @transform_3(%arg0: i32) -> (i32, i32, i32) {
    %c0_i32 = arith.constant 0 : i32
    %c0_i32_0 = arith.constant 0 : i32
    %c0_i32_1 = arith.constant 0 : i32
    %c0_i32_2 = arith.constant 0 : i32
    return %c0_i32, %c0_i32_0, %c0_i32_1 : i32, i32, i32
  }
  func.func @transform_4(%arg0: i32) -> (i32, i32, i32) {
    %c0_i32 = arith.constant 0 : i32
    %c0_i32_0 = arith.constant 0 : i32
    %c0_i32_1 = arith.constant 0 : i32
    %c0_i32_2 = arith.constant 0 : i32
    return %c0_i32, %c0_i32_0, %c0_i32_1 : i32, i32, i32
  }
  func.func @transform_5(%arg0: i32) -> (i32, i32) {
    %c0_i32 = arith.constant 0 : i32
    %c0_i32_0 = arith.constant 0 : i32
    %c0_i32_1 = arith.constant 0 : i32
    return %c0_i32, %c0_i32_0 : i32, i32
  }
  func.func @transform_6(%arg0: i32) -> (i32, i32, i32) {
    %c0_i32 = arith.constant 0 : i32
    %c0_i32_0 = arith.constant 0 : i32
    %c0_i32_1 = arith.constant 0 : i32
    return %arg0, %c0_i32, %c0_i32_0 : i32, i32, i32
  }
}

</mosaic_0001>

<llo_original>
// kernel: tpu_custom_call.1
$region0: #{tpu_custom_call.1}
  #allocation0 [shape = 'u32[]', space=smem, size = 0x4, offset = 0x4, fixed_abs, tag = 'smem constant byte address 0x4 - core index']
  #allocation1 [shape = 'u32[144,128]{1,0:T(1,128)}', space=vmem, size = 0x12000, scoped, tag = 'internal scratch']
  #allocation2 [shape = 'f32[8,32]{1,0:T(8,128)}', space=vmem, size = 0x1000, scoped, tag = 'scratch operand']
  %s0 = inlined_call_operand.hbm [shape: f32[2,8,32], index: 0, kind: input, shape index: {}]
  %s1 = inlined_call_operand.hbm [shape: f32[2,8,8], index: 1, kind: input, shape index: {}]
  %s2 = inlined_call_operand.hbm [shape: f32[4,32,24], index: 2, kind: input, shape index: {}]
  %s3 = inlined_call_operand.hbm [shape: f32[4,1,24], index: 3, kind: input, shape index: {}]
  %s4 = inlined_call_operand.hbm [shape: f32[4,8,32], index: 4, kind: input, shape index: {}]
  %s5 = inlined_call_operand.hbm [shape: f32[1,32], index: 5, kind: input, shape index: {}]
  %s6 = inlined_call_operand.hbm [shape: f32[2,8,32], index: 6, kind: output, shape index: {}]
  %s7 = sld [smem:[#allocation0]]
  $region88: #{tpu_custom_call.1} parent=0
    _
  %s9 = ssub.s32 1, %s7
  %s10 = scalar_select 0, %s9, %s7
  $region1: #{tpu_custom_call.1} parent=0
    #allocation3 [shape = 'u8[8192]{0}', space=vmem, size = 0x2000, scoped, tag = 'input window, operand 0']
    #allocation4 [shape = 's32[2]{0}', space=sflag, size = 0x8, scoped, tag = 'scoped memory for tpu_custom_call.1']
    #allocation5 [shape = 's32[2]{0}', space=sflag, size = 0x8, scoped, tag = 'scoped memory for tpu_custom_call.1']
    #allocation6 [shape = 'u8[8192]{0}', space=vmem, size = 0x2000, scoped, tag = 'input window, operand 1']
    #allocation7 [shape = 's32[2]{0}', space=sflag, size = 0x8, scoped, tag = 'scoped memory for tpu_custom_call.1']
    #allocation8 [shape = 'u8[65536]{0}', space=vmem, size = 0x10000, scoped, tag = 'input window, operand 2, single buffered']
    #allocation9 [shape = 'u8[2048]{0}', space=vmem, size = 0x800, scoped, tag = 'input window, operand 3, single buffered']
    #allocation10 [shape = 's32[1]{0}', space=sflag, size = 0x4, scoped, tag = 'scoped memory for tpu_custom_call.1']
    #allocation11 [shape = 'u8[16384]{0}', space=vmem, size = 0x4000, scoped, tag = 'input window, operand 4, single buffered']
    #allocation12 [shape = 'u8[512]{0}', space=vmem, size = 0x400, scoped, tag = 'input window, operand 5, single buffered']
    #allocation13 [shape = 's32[1]{0}', space=sflag, size = 0x4, scoped, tag = 'scoped memory for tpu_custom_call.1']
    #allocation14 [shape = 'u8[8192]{0}', space=vmem, size = 0x2000, scoped, tag = 'output window, operand 0']
    %11 = vsyncpa [#allocation4], 0
    %s12 = scalar_lea.sflag [#allocation4], 1
    %13 = vsyncpa %s12, 0
    %14 = vsyncpa [#allocation7], 0
    %s15 = scalar_lea.sflag [#allocation7], 1
    %16 = vsyncpa %s15, 0
    %17 = vsyncpa [#allocation10], 0
    %18 = vsyncpa [#allocation13], 0
    %19 = vsyncpa [#allocation5], 0
    %s20 = scalar_lea.sflag [#allocation5], 1
    %21 = vsyncpa %s20, 0
    loop: start=0, step=1, limit=4
    $region2: #{tpu_custom_call.1} parent=1 // loop_pre_header
      _
    $region3: #{tpu_custom_call.1} parent=1 // loop_header
      %s23 = sphi 0, %s27
      %p24 = scmp.ge.s32.totalorder %s23, 4
      %s33 = sphi 0, %s35
      %s36 = sphi 0, %s33
      %s37 = sphi 0, %s36
      %s53 = sphi 0, %s37
      %s59 = sphi 0, %s61
      %s62 = sphi 0, %s59
      %s63 = sphi 0, %s62
      %s79 = sphi 0, %s63
      %s83 = sphi 0, %s83
      %s85 = sphi 0, %s83
      %s86 = sphi 0, %s85
      %s100 = sphi 0, %s86
      %s104 = sphi 0, %s104
      %s106 = sphi 0, %s104
      %s107 = sphi 0, %s106
      %s121 = sphi 0, %s107
      %s125 = sphi 0, %s125
      %s127 = sphi 0, %s125
      %s128 = sphi 0, %s127
      %s142 = sphi 0, %s128
      %s146 = sphi 0, %s146
      %s148 = sphi 0, %s146
      %s149 = sphi 0, %s148
      %s163 = sphi 0, %s149
      %s169 = sphi 0, %s171
      %s172 = sphi 0, %s169
      %s173 = sphi 0, %s172
      %s189 = sphi 0, %s173
    $region4: #{tpu_custom_call.1} parent=1 // loop_header_branch
      %26 = sbr.rel (%p24) target = $region8
    $region5: #{tpu_custom_call.1} parent=1 // loop_body
      %s28 = ssub.s32 %s23, 1
      %s29 = ssub.s32 %s23, 2
      %s30 = sadd.s32 %s23, 1
      %s31 = ssub.s32 %s23, %s30
      %p32 = scmp.eq.s32.totalorder %s31, 0
      %s34 = sadd.s32 %s33, 1
      %s35 = scalar_select %p32, %s33, %s34
      %p38 = pneg %p32
      %p39 = scmp.eq.s32.totalorder %s23, 1
      %p40 = por %p38, %p39
      %p41 = scmp.ne.s32.totalorder %s33, %s36
      %p42 = scmp.eq.s32.totalorder %s23, 0
      %p43 = por %p41, %p42
      %p44 = scmp.ne.s32.totalorder %s33, %s36
      %p45 = scmp.eq.s32.totalorder %s28, 1
      %p46 = por %p44, %p45
      %p47 = scmp.ne.s32.totalorder %s36, %s37
      %p48 = scmp.eq.s32.totalorder %s28, 0
      %p49 = por %p47, %p48
      %p50 = scmp.ne.s32.totalorder %s36, %s37
      %p51 = scmp.eq.s32.totalorder %s29, 1
      %p52 = por %p50, %p51
      %p54 = scmp.ne.s32.totalorder %s37, %s53
      %p55 = scmp.eq.s32.totalorder %s29, 0
      %p56 = por %p54, %p55
      %s57 = ssub.s32 %s23, %s30
      %p58 = scmp.eq.s32.totalorder %s57, 0
      %s60 = sadd.s32 %s59, 1
      %s61 = scalar_select %p58, %s59, %s60
      %p64 = pneg %p58
      %p65 = scmp.eq.s32.totalorder %s23, 1
      %p66 = por %p64, %p65
      %p67 = scmp.ne.s32.totalorder %s59, %s62
      %p68 = scmp.eq.s32.totalorder %s23, 0
      %p69 = por %p67, %p68
      %p70 = scmp.ne.s32.totalorder %s59, %s62
      %p71 = scmp.eq.s32.totalorder %s28, 1
      %p72 = por %p70, %p71
      %p73 = scmp.ne.s32.totalorder %s62, %s63
      %p74 = scmp.eq.s32.totalorder %s28, 0
      %p75 = por %p73, %p74
      %p76 = scmp.ne.s32.totalorder %s62, %s63
      %p77 = scmp.eq.s32.totalorder %s29, 1
      %p78 = por %p76, %p77
      %p80 = scmp.ne.s32.totalorder %s63, %s79
      %p81 = scmp.eq.s32.totalorder %s29, 0
      %p82 = por %p80, %p81
      %s84 = sadd.s32 %s83, 1
      %p87 = scmp.eq.s32.totalorder %s23, 1
      %p88 = scmp.ne.s32.totalorder %s83, %s85
      %p89 = scmp.eq.s32.totalorder %s23, 0
      %p90 = por %p88, %p89
      %p91 = scmp.ne.s32.totalorder %s83, %s85
      %p92 = scmp.eq.s32.totalorder %s28, 1
      %p93 = por %p91, %p92
      %p94 = scmp.ne.s32.totalorder %s85, %s86
      %p95 = scmp.eq.s32.totalorder %s28, 0
      %p96 = por %p94, %p95
      %p97 = scmp.ne.s32.totalorder %s85, %s86
      %p98 = scmp.eq.s32.totalorder %s29, 1
      %p99 = por %p97, %p98
      %p101 = scmp.ne.s32.totalorder %s86, %s100
      %p102 = scmp.eq.s32.totalorder %s29, 0
      %p103 = por %p101, %p102
      %s105 = sadd.s32 %s104, 1
      %p108 = scmp.eq.s32.totalorder %s23, 1
      %p109 = scmp.ne.s32.totalorder %s104, %s106
      %p110 = scmp.eq.s32.totalorder %s23, 0
      %p111 = por %p109, %p110
      %p112 = scmp.ne.s32.totalorder %s104, %s106
      %p113 = scmp.eq.s32.totalorder %s28, 1
      %p114 = por %p112, %p113
      %p115 = scmp.ne.s32.totalorder %s106, %s107
      %p116 = scmp.eq.s32.totalorder %s28, 0
      %p117 = por %p115, %p116
      %p118 = scmp.ne.s32.totalorder %s106, %s107
      %p119 = scmp.eq.s32.totalorder %s29, 1
      %p120 = por %p118, %p119
      %p122 = scmp.ne.s32.totalorder %s107, %s121
      %p123 = scmp.eq.s32.totalorder %s29, 0
      %p124 = por %p122, %p123
      %s126 = sadd.s32 %s125, 1
      %p129 = scmp.eq.s32.totalorder %s23, 1
      %p130 = scmp.ne.s32.totalorder %s125, %s127
      %p131 = scmp.eq.s32.totalorder %s23, 0
      %p132 = por %p130, %p131
      %p133 = scmp.ne.s32.totalorder %s125, %s127
      %p134 = scmp.eq.s32.totalorder %s28, 1
      %p135 = por %p133, %p134
      %p136 = scmp.ne.s32.totalorder %s127, %s128
      %p137 = scmp.eq.s32.totalorder %s28, 0
      %p138 = por %p136, %p137
      %p139 = scmp.ne.s32.totalorder %s127, %s128
      %p140 = scmp.eq.s32.totalorder %s29, 1
      %p141 = por %p139, %p140
      %p143 = scmp.ne.s32.totalorder %s128, %s142
      %p144 = scmp.eq.s32.totalorder %s29, 0
      %p145 = por %p143, %p144
      %s147 = sadd.s32 %s146, 1
      %p150 = scmp.eq.s32.totalorder %s23, 1
      %p151 = scmp.ne.s32.totalorder %s146, %s148
      %p152 = scmp.eq.s32.totalorder %s23, 0
      %p153 = por %p151, %p152
      %p154 = scmp.ne.s32.totalorder %s146, %s148
      %p155 = scmp.eq.s32.totalorder %s28, 1
      %p156 = por %p154, %p155
      %p157 = scmp.ne.s32.totalorder %s148, %s149
      %p158 = scmp.eq.s32.totalorder %s28, 0
      %p159 = por %p157, %p158
      %p160 = scmp.ne.s32.totalorder %s148, %s149
      %p161 = scmp.eq.s32.totalorder %s29, 1
      %p162 = por %p160, %p161
      %p164 = scmp.ne.s32.totalorder %s149, %s163
      %p165 = scmp.eq.s32.totalorder %s29, 0
      %p166 = por %p164, %p165
      %s167 = ssub.s32 %s23, %s30
      %p168 = scmp.eq.s32.totalorder %s167, 0
      %s170 = sadd.s32 %s169, 1
      %s171 = scalar_select %p168, %s169, %s170
      %p174 = pneg %p168
      %p175 = scmp.eq.s32.totalorder %s23, 1
      %p176 = por %p174, %p175
      %p177 = scmp.ne.s32.totalorder %s169, %s172
      %p178 = scmp.eq.s32.totalorder %s23, 0
      %p179 = por %p177, %p178
      %p180 = scmp.ne.s32.totalorder %s169, %s172
      %p181 = scmp.eq.s32.totalorder %s28, 1
      %p182 = por %p180, %p181
      %p183 = scmp.ne.s32.totalorder %s172, %s173
      %p184 = scmp.eq.s32.totalorder %s28, 0
      %p185 = por %p183, %p184
      %p186 = scmp.ne.s32.totalorder %s172, %s173
      %p187 = scmp.eq.s32.totalorder %s29, 1
      %p188 = por %p186, %p187
      %p190 = scmp.ne.s32.totalorder %s173, %s189
      %p191 = scmp.eq.s32.totalorder %s29, 0
      %p192 = por %p190, %p191
      %p193 = scmp.le.s32.totalorder 1, %s23
      %p194 = scmp.lt.s32.totalorder %s23, 3
      %p195 = pnand %p193, %p194
      %p196 = pneg %p195
      // Predicated region
      $region9: #{tpu_custom_call.1} parent=5 // pred_check
        _
      $region10: #{tpu_custom_call.1} parent=5 // pred_check_branch
        %198 = sbr.rel (%p195) target = $region12
      $region11: #{tpu_custom_call.1} parent=5 // pred_region
        %s199 = ssub.s32 %s23, 1
        // Predicated region
        $region13: #{tpu_custom_call.1} parent=11 // pred_check
          %p200 = pneg %p96
        $region14: #{tpu_custom_call.1} parent=11 // pred_check_branch
          %202 = sbr.rel (%p200) target = $region16
        $region15: #{tpu_custom_call.1} parent=11 // pred_region
          %s204 = ssub.s32 2048, 2048
          %205 = vsyncadd [#allocation7], %s204
          %s206 = sshll.u32 [#allocation8], 4
          %s207 = int_to_ptr.vmem [resolvable:$true] %s206
          %212 = dma.hbm_to_vmem [thread:$0]  %s2, 2048, %s207, [#allocation7], 128, 128, 8
        $region16: #{tpu_custom_call.1} parent=11 // pred_fallthru
          _
        // Predicated region
        $region17: #{tpu_custom_call.1} parent=11 // pred_check
          %p213 = pneg %p117
        $region18: #{tpu_custom_call.1} parent=11 // pred_check_branch
          %215 = sbr.rel (%p213) target = $region20
        $region19: #{tpu_custom_call.1} parent=11 // pred_region
          %s217 = ssub.s32 64, 64
          %218 = vsyncadd [#allocation10], %s217
          %s219 = sshll.u32 [#allocation9], 4
          %s220 = int_to_ptr.vmem [resolvable:$true] %s219
          %225 = dma.hbm_to_vmem [thread:$0]  %s3, 64, %s220, [#allocation10], 16, 16, 1
        $region20: #{tpu_custom_call.1} parent=11 // pred_fallthru
          _
        // Predicated region
        $region21: #{tpu_custom_call.1} parent=11 // pred_check
          %p226 = pneg %p138
        $region22: #{tpu_custom_call.1} parent=11 // pred_check_branch
          %228 = sbr.rel (%p226) target = $region24
        $region23: #{tpu_custom_call.1} parent=11 // pred_region
          %s230 = ssub.s32 512, 512
          %231 = vsyncadd [#allocation10], %s230
          %s232 = sshll.u32 [#allocation11], 4
          %s233 = int_to_ptr.vmem [resolvable:$true] %s232
          %238 = dma.hbm_to_vmem [thread:$0]  %s4, 512, %s233, [#allocation10], 128, 128, 8
        $region24: #{tpu_custom_call.1} parent=11 // pred_fallthru
          _
        // Predicated region
        $region25: #{tpu_custom_call.1} parent=11 // pred_check
          %p239 = pneg %p159
        $region26: #{tpu_custom_call.1} parent=11 // pred_check_branch
          %241 = sbr.rel (%p239) target = $region28
        $region27: #{tpu_custom_call.1} parent=11 // pred_region
          %s243 = ssub.s32 16, 16
          %244 = vsyncadd [#allocation13], %s243
          %s246 = sshll.u32 [#allocation12], 4
          %s247 = int_to_ptr.vmem [resolvable:$true] %s246
          %249 = dma.hbm_to_vmem [thread:$0]  %s5, 16, %s247, [#allocation13]
        $region28: #{tpu_custom_call.1} parent=11 // pred_fallthru
          _
      $region12: #{tpu_custom_call.1} parent=5 // pred_fallthru
        _
      %p250 = scmp.lt.s32.totalorder %s23, 2
      // Predicated region
      $region29: #{tpu_custom_call.1} parent=5 // pred_check
        %p251 = pneg %p250
      $region30: #{tpu_custom_call.1} parent=5 // pred_check_branch
        %253 = sbr.rel (%p251) target = $region32
      $region31: #{tpu_custom_call.1} parent=5 // pred_region
        // Predicated region
        $region33: #{tpu_custom_call.1} parent=31 // pred_check
          %p254 = pneg %p43
        $region34: #{tpu_custom_call.1} parent=31 // pred_check_branch
          %256 = sbr.rel (%p254) target = $region36
        $region35: #{tpu_custom_call.1} parent=31 // pred_region
          %s257 = sand.u32 %s33, 1
          %s258 = scalar_lea.sflag [#allocation4], %s257
          %s259 = sand.u32 %s33, 1
          %s260 = smul.addr %s259, 8
          %s261 = scalar_lea.vmem [#allocation3], %s260
          %s263 = ssub.s32 128, 128
          %264 = vsyncadd %s258, %s263
          %s265 = smul.addr %s23, 128
          %s266 = scalar_lea.hbm %s0, %s265
          %s268 = sshll.u32 %s261, 4
          %s269 = int_to_ptr.vmem [resolvable:$true] %s268
          %271 = dma.hbm_to_vmem [thread:$0]  %s266, 128, %s269, %s258
        $region36: #{tpu_custom_call.1} parent=31 // pred_fallthru
          _
        // Predicated region
        $region37: #{tpu_custom_call.1} parent=31 // pred_check
          %p272 = pneg %p69
        $region38: #{tpu_custom_call.1} parent=31 // pred_check_branch
          %274 = sbr.rel (%p272) target = $region40
        $region39: #{tpu_custom_call.1} parent=31 // pred_region
          %s275 = sand.u32 %s23, 1
          %s276 = scalar_lea.sflag [#allocation7], %s275
          %s277 = sand.u32 %s59, 1
          %s278 = smul.addr %s277, 8
          %s279 = scalar_lea.vmem [#allocation6], %s278
          %s281 = ssub.s32 128, 128
          %282 = vsyncadd %s276, %s281
          %s283 = smul.addr %s23, 128
          %s284 = scalar_lea.hbm %s1, %s283
          %s286 = sshll.u32 %s279, 4
          %s287 = int_to_ptr.vmem [resolvable:$true] %s286
          %289 = dma.hbm_to_vmem [thread:$0]  %s284, 128, %s287, %s276
        $region40: #{tpu_custom_call.1} parent=31 // pred_fallthru
          _
      $region32: #{tpu_custom_call.1} parent=5 // pred_fallthru
        _
      %p290 = scmp.le.s32.totalorder 1, %s23
      %p291 = scmp.lt.s32.totalorder %s23, 3
      %p292 = pnand %p290, %p291
      %p293 = pneg %p292
      // Predicated region
      $region41: #{tpu_custom_call.1} parent=5 // pred_check
        _
      $region42: #{tpu_custom_call.1} parent=5 // pred_check_branch
        %295 = sbr.rel (%p292) target = $region44
      $region43: #{tpu_custom_call.1} parent=5 // pred_region
        %s296 = ssub.s32 %s23, 1
        %s297 = sand.u32 %s36, 1
        %s298 = scalar_lea.sflag [#allocation4], %s297
        %s299 = sand.u32 %s36, 1
        %s300 = smul.addr %s299, 8
        %s301 = scalar_lea.vmem [#allocation3], %s300
        // Predicated region
        $region45: #{tpu_custom_call.1} parent=43 // pred_check
          %p302 = pneg %p49
        $region46: #{tpu_custom_call.1} parent=43 // pred_check_branch
          %304 = sbr.rel (%p302) target = $region48
        $region47: #{tpu_custom_call.1} parent=43 // pred_region
          %305 = dma.done %s298, 128
        $region48: #{tpu_custom_call.1} parent=43 // pred_fallthru
          _
        %s306 = sand.u32 %s28, 1
        %s307 = scalar_lea.sflag [#allocation7], %s306
        %s308 = sand.u32 %s62, 1
        %s309 = smul.addr %s308, 8
        %s310 = scalar_lea.vmem [#allocation6], %s309
        // Predicated region
        $region49: #{tpu_custom_call.1} parent=43 // pred_check
          %p311 = pneg %p75
        $region50: #{tpu_custom_call.1} parent=43 // pred_check_branch
          %313 = sbr.rel (%p311) target = $region52
        $region51: #{tpu_custom_call.1} parent=43 // pred_region
          %314 = dma.done %s307, 128
        $region52: #{tpu_custom_call.1} parent=43 // pred_fallthru
          _
        // Predicated region
        $region53: #{tpu_custom_call.1} parent=43 // pred_check
          %p315 = pneg %p96
        $region54: #{tpu_custom_call.1} parent=43 // pred_check_branch
          %317 = sbr.rel (%p315) target = $region56
        $region55: #{tpu_custom_call.1} parent=43 // pred_region
          %318 = dma.done [#allocation7], 2048
        $region56: #{tpu_custom_call.1} parent=43 // pred_fallthru
          _
        // Predicated region
        $region57: #{tpu_custom_call.1} parent=43 // pred_check
          %p319 = pneg %p117
        $region58: #{tpu_custom_call.1} parent=43 // pred_check_branch
          %321 = sbr.rel (%p319) target = $region60
        $region59: #{tpu_custom_call.1} parent=43 // pred_region
          %322 = dma.done [#allocation10], 64
        $region60: #{tpu_custom_call.1} parent=43 // pred_fallthru
          _
        // Predicated region
        $region61: #{tpu_custom_call.1} parent=43 // pred_check
          %p323 = pneg %p138
        $region62: #{tpu_custom_call.1} parent=43 // pred_check_branch
          %325 = sbr.rel (%p323) target = $region64
        $region63: #{tpu_custom_call.1} parent=43 // pred_region
          %326 = dma.done [#allocation10], 512
        $region64: #{tpu_custom_call.1} parent=43 // pred_fallthru
          _
        // Predicated region
        $region65: #{tpu_custom_call.1} parent=43 // pred_check
          %p327 = pneg %p159
        $region66: #{tpu_custom_call.1} parent=43 // pred_check_branch
          %329 = sbr.rel (%p327) target = $region68
        $region67: #{tpu_custom_call.1} parent=43 // pred_region
          %330 = dma.done [#allocation13], 16
        $region68: #{tpu_custom_call.1} parent=43 // pred_fallthru
          _
        %s331 = sand.u32 %s36, 1
        %s332 = scalar_lea.sflag [#allocation4], %s331
        %s333 = sand.u32 %s36, 1
        %s334 = smul.addr %s333, 8
        %s335 = scalar_lea.vmem [#allocation3], %s334
        %p336 = pneg %p49
        %p337 = pneg %p46
        %s338 = sand.u32 %s28, 1
        %s339 = scalar_lea.sflag [#allocation7], %s338
        %s340 = sand.u32 %s62, 1
        %s341 = smul.addr %s340, 8
        %s342 = scalar_lea.vmem [#allocation6], %s341
        %p343 = pneg %p75
        %p344 = pneg %p72
        %p345 = pneg %p96
        %p346 = pneg %p93
        %p347 = pneg %p117
        %p348 = pneg %p114
        %p349 = pneg %p138
        %p350 = pneg %p135
        %p351 = pneg %p159
        %p352 = pneg %p156
        %p353 = pneg %p185
        %p354 = pneg %p182
        %s355 = sand.u32 %s172, 1
        %s356 = scalar_lea.sflag [#allocation5], %s355
        %s357 = sand.u32 %s172, 1
        %s358 = smul.addr %s357, 8
        %s359 = scalar_lea.vmem [#allocation14], %s358
        %v360 = vld [vmem:[#allocation12] sm:$0x1]
        %v362 = vlaneseq
        %v363 = vshrl.u32 %v362, 7
        %v364 = vsub.s32 0, %v363
        %v365 = vrot.slane %v360, %v364
        %vm367 = vcmask 261120
        %368 = vst.msk [vmem:[#allocation2] sm:$0xff] %vm367, %v365
        loop: start=0, step=1, limit=4
        $region69: #{tpu_custom_call.1} parent=43 // loop_pre_header
          _
        $region70: #{tpu_custom_call.1} parent=43 // loop_header
          %s370 = sphi 0, %s374
          %p371 = scmp.ge.s32.totalorder %s370, 4
        $region71: #{tpu_custom_call.1} parent=43 // loop_header_branch
          %373 = sbr.rel (%p371) target = $region75
        $region72: #{tpu_custom_call.1} parent=43 // loop_body
          %v375 = vld [vmem:[%s301] sm:$0xff]
          %s376 = smul.u32 %s370, 32
          %s377 = scalar_lea.vmem [#allocation8], %s376
          %v378 = vld [vmem:[%s377] sm:$0xff]
          %v379 = vld [vmem:[%s377 + $0x8] sm:$0xff]
          %v380 = vld [vmem:[%s377 + $0x10] sm:$0xff]
          %v381 = vld [vmem:[%s377 + $0x18] sm:$0xff]
          %s382 = scalar_lea.vmem [#allocation9], %s370
          %v383 = vld [vmem:[%s382] sm:$0x1]
          %v385 = vlaneseq
          %v386 = vshrl.u32 %v385, 7
          %v387 = vsub.s32 0, %v386
          %v388 = vrot.slane %v383, %v387
          %v391 = vsel %vm367, %v375, 0
          %393 = vmatprep.subr.mxu0 0.0
          %394 = vmatpush1.msra.mxu0 %v378
          %395 = vmatprep.subr.mxu0 0.0
          %396 = vmatpush1.msra.mxu0 %v379
          %397 = vmatprep.subr.mxu0 0.0
          %398 = vmatpush1.msra.mxu0 %v380
          %399 = vmatprep.subr.mxu0 0.0
          %400 = vmatpush1.msra.mxu0 %v381
          %401 = vmatprep.subr.mxu0 0.0
          %402 = vmatpush1.msra.mxu0 0.0
          %403 = vmatprep.subr.mxu0 0.0
          %404 = vmatpush1.msra.mxu0 0.0
          %405 = vmatprep.subr.mxu0 0.0
          %406 = vmatpush1.msra.mxu0 0.0
          %407 = vmatprep.subr.mxu0 0.0
          %408 = vmatpush1.msra.mxu0 0.0
          %409 = vmatprep.subr.mxu0 0.0
          %410 = vmatpush1.msra.mxu0 0.0
          %411 = vmatprep.subr.mxu0 0.0
          %412 = vmatpush1.msra.mxu0 0.0
          %413 = vmatprep.subr.mxu0 0.0
          %414 = vmatpush1.msra.mxu0 0.0
          %415 = vmatprep.subr.mxu0 0.0
          %416 = vmatpush1.msra.mxu0 0.0
          %417 = vmatprep.subr.mxu0 0.0
          %418 = vmatpush1.msra.mxu0 0.0
          %419 = vmatprep.subr.mxu0 0.0
          %420 = vmatpush1.msra.mxu0 0.0
          %421 = vmatprep.subr.mxu0 0.0
          %422 = vmatpush1.msra.mxu0 0.0
          %423 = vmatprep.subr.mxu0 0.0
          %424 = vmatpush1.msra.mxu0 0.0
          %425 = vmatprep.subr.mxu0 0.0
          %426 = vmatpush1.msra.mxu0 0.0
          %427 = vmatprep.subr.mxu0 0.0
          %428 = vmatpush1.msra.mxu0 0.0
          %429 = vmatprep.subr.mxu0 0.0
          %430 = vmatpush1.msra.mxu0 0.0
          %431 = vmatprep.subr.mxu0 0.0
          %432 = vmatpush1.msra.mxu0 0.0
          %433 = vmatprep.subr.mxu0 0.0
          %434 = vmatpush1.msra.mxu0 0.0
          %435 = vmatprep.subr.mxu0 0.0
          %436 = vmatpush1.msra.mxu0 0.0
          %437 = vmatprep.subr.mxu0 0.0
          %438 = vmatpush1.msra.mxu0 0.0
          %439 = vmatprep.subr.mxu0 0.0
          %440 = vmatpush1.msra.mxu0 0.0
          %441 = vmatprep.subr.mxu0 0.0
          %442 = vmatpush1.msra.mxu0 0.0
          %443 = vmatprep.subr.mxu0 0.0
          %444 = vmatpush1.msra.mxu0 0.0
          %445 = vmatprep.subr.mxu0 0.0
          %446 = vmatpush1.msra.mxu0 0.0
          %447 = vmatprep.subr.mxu0 0.0
          %448 = vmatpush1.msra.mxu0 0.0
          %449 = vmatprep.subr.mxu0 0.0
          %450 = vmatpush1.msra.mxu0 0.0
          %451 = vmatprep.subr.mxu0 0.0
          %452 = vmatpush1.msra.mxu0 0.0
          %453 = vmatprep.subr.mxu0 0.0
          %454 = vmatpush1.msra.mxu0 0.0
          %455 = vmatprep.subr.mxu0 0.0
          %456 = vmatpush1.msra.mxu0 0.0
          %457 = vmatprep.mubr.f32.mxu0 0.0
          %458 = vmatmul.mubr.f32.gmra.mrb[0].mxu0 %v391
          %v459 = vpop.f32.mrb[0].mxu0
          %v460 = vadd.f32 %v388, %v459
          %v461 = vpop.f32.mrb[0].mxu0
          %462 = vdwg.mxu0
          %v463 = vmul.f32 %v460, 0.35355338
          %v464 = vld [vmem:[%s310] sm:$0xff]
          %466 = vrot.lane.b32.xlu0 %v460, 120
          %v467 = vpop.permute.xlu0 %466
          %vm468 = vcmask 64512
          %v470 = vsel %vm468, %v463, 0
          %v472 = vsel %vm468, %v467, 0
          %474 = vmatprep.subr.mxu0 0.0
          %475 = vmatpush1.xpose.msra.mxu0 %v472
          %476 = vmatprep.subr.mxu0 0.0
          %477 = vmatpush1.xpose.msra.mxu0 0.0
          %478 = vmatprep.subr.mxu0 0.0
          %479 = vmatpush1.xpose.msra.mxu0 0.0
          %480 = vmatprep.subr.mxu0 0.0
          %481 = vmatpush1.xpose.msra.mxu0 0.0
          %482 = vmatprep.subr.mxu0 0.0
          %483 = vmatpush1.xpose.msra.mxu0 0.0
          %484 = vmatprep.subr.mxu0 0.0
          %485 = vmatpush1.xpose.msra.mxu0 0.0
          %486 = vmatprep.subr.mxu0 0.0
          %487 = vmatpush1.xpose.msra.mxu0 0.0
          %488 = vmatprep.subr.mxu0 0.0
          %489 = vmatpush1.xpose.msra.mxu0 0.0
          %490 = vmatprep.subr.mxu0 0.0
          %491 = vmatpush1.xpose.msra.mxu0 0.0
          %492 = vmatprep.subr.mxu0 0.0
          %493 = vmatpush1.xpose.msra.mxu0 0.0
          %494 = vmatprep.subr.mxu0 0.0
          %495 = vmatpush1.xpose.msra.mxu0 0.0
          %496 = vmatprep.subr.mxu0 0.0
          %497 = vmatpush1.xpose.msra.mxu0 0.0
          %498 = vmatprep.subr.mxu0 0.0
          %499 = vmatpush1.xpose.msra.mxu0 0.0
          %500 = vmatprep.subr.mxu0 0.0
          %501 = vmatpush1.xpose.msra.mxu0 0.0
          %502 = vmatprep.subr.mxu0 0.0
          %503 = vmatpush1.xpose.msra.mxu0 0.0
          %504 = vmatprep.subr.mxu0 0.0
          %505 = vmatpush1.xpose.msra.mxu0 0.0
          %506 = vmatprep.subr.mxu0 0.0
          %507 = vmatpush1.xpose.msra.mxu0 0.0
          %508 = vmatprep.subr.mxu0 0.0
          %509 = vmatpush1.xpose.msra.mxu0 0.0
          %510 = vmatprep.subr.mxu0 0.0
          %511 = vmatpush1.xpose.msra.mxu0 0.0
          %512 = vmatprep.subr.mxu0 0.0
          %513 = vmatpush1.xpose.msra.mxu0 0.0
          %514 = vmatprep.subr.mxu0 0.0
          %515 = vmatpush1.xpose.msra.mxu0 0.0
          %516 = vmatprep.subr.mxu0 0.0
          %517 = vmatpush1.xpose.msra.mxu0 0.0
          %518 = vmatprep.subr.mxu0 0.0
          %519 = vmatpush1.xpose.msra.mxu0 0.0
          %520 = vmatprep.subr.mxu0 0.0
          %521 = vmatpush1.xpose.msra.mxu0 0.0
          %522 = vmatprep.subr.mxu0 0.0
          %523 = vmatpush1.xpose.msra.mxu0 0.0
          %524 = vmatprep.subr.mxu0 0.0
          %525 = vmatpush1.xpose.msra.mxu0 0.0
          %526 = vmatprep.subr.mxu0 0.0
          %527 = vmatpush1.xpose.msra.mxu0 0.0
          %528 = vmatprep.subr.mxu0 0.0
          %529 = vmatpush1.xpose.msra.mxu0 0.0
          %530 = vmatprep.subr.mxu0 0.0
          %531 = vmatpush1.xpose.msra.mxu0 0.0
          %532 = vmatprep.subr.mxu0 0.0
          %533 = vmatpush1.xpose.msra.mxu0 0.0
          %534 = vmatprep.subr.mxu0 0.0
          %535 = vmatpush1.xpose.msra.mxu0 0.0
          %536 = vmatprep.subr.mxu0 0.0
          %537 = vmatpush1.xpose.msra.mxu0 0.0
          %538 = vmatprep.mubr.f32.mxu0 0.0
          %539 = vmatmul.mubr.f32.gmra.mrb[0].mxu0 %v470
          %v540 = vpop.f32.mrb[0].mxu0
          %v541 = vadd.f32 %v464, %v540
          %v542 = vpop.f32.mrb[0].mxu0
          %543 = vdwg.mxu0
          %v544 = vsel %vm468, %v541, -inf
          %545 = vmax.xlane.f32.xlu0 %v544
          %v546 = vpop.xlane.xlu0 %545
          %v547 = vsub.f32 %v541, %v546
          %v548 = vmul.f32 %v547, 1.442695
          %v549 = vpow.pop %v548
          %v550 = vsel %vm468, %v549, 0.0
          %551 = vadd.xlane.f32.xlu0 %v550
          %v552 = vpop.xlane.xlu0 %551
          %v553 = vrcp.pop %v552
          %v554 = vmul.f32 %v549, %v553
          %555 = vrot.lane.b32.xlu0 %v460, 112
          %v556 = vpop.permute.xlu0 %555
          %v559 = vsel %vm468, %v554, 0
          %561 = vmatprep.subr.mxu0 0.0
          %562 = vmatpush1.msra.mxu0 %v556
          %563 = vmatprep.subr.mxu0 0.0
          %564 = vmatpush1.msra.mxu0 0.0
          %565 = vmatprep.subr.mxu0 0.0
          %566 = vmatpush1.msra.mxu0 0.0
          %567 = vmatprep.subr.mxu0 0.0
          %568 = vmatpush1.msra.mxu0 0.0
          %569 = vmatprep.subr.mxu0 0.0
          %570 = vmatpush1.msra.mxu0 0.0
          %571 = vmatprep.subr.mxu0 0.0
          %572 = vmatpush1.msra.mxu0 0.0
          %573 = vmatprep.subr.mxu0 0.0
          %574 = vmatpush1.msra.mxu0 0.0
          %575 = vmatprep.subr.mxu0 0.0
          %576 = vmatpush1.msra.mxu0 0.0
          %577 = vmatprep.subr.mxu0 0.0
          %578 = vmatpush1.msra.mxu0 0.0
          %579 = vmatprep.subr.mxu0 0.0
          %580 = vmatpush1.msra.mxu0 0.0
          %581 = vmatprep.subr.mxu0 0.0
          %582 = vmatpush1.msra.mxu0 0.0
          %583 = vmatprep.subr.mxu0 0.0
          %584 = vmatpush1.msra.mxu0 0.0
          %585 = vmatprep.subr.mxu0 0.0
          %586 = vmatpush1.msra.mxu0 0.0
          %587 = vmatprep.subr.mxu0 0.0
          %588 = vmatpush1.msra.mxu0 0.0
          %589 = vmatprep.subr.mxu0 0.0
          %590 = vmatpush1.msra.mxu0 0.0
          %591 = vmatprep.subr.mxu0 0.0
          %592 = vmatpush1.msra.mxu0 0.0
          %593 = vmatprep.subr.mxu0 0.0
          %594 = vmatpush1.msra.mxu0 0.0
          %595 = vmatprep.subr.mxu0 0.0
          %596 = vmatpush1.msra.mxu0 0.0
          %597 = vmatprep.subr.mxu0 0.0
          %598 = vmatpush1.msra.mxu0 0.0
          %599 = vmatprep.subr.mxu0 0.0
          %600 = vmatpush1.msra.mxu0 0.0
          %601 = vmatprep.subr.mxu0 0.0
          %602 = vmatpush1.msra.mxu0 0.0
          %603 = vmatprep.subr.mxu0 0.0
          %604 = vmatpush1.msra.mxu0 0.0
          %605 = vmatprep.subr.mxu0 0.0
          %606 = vmatpush1.msra.mxu0 0.0
          %607 = vmatprep.subr.mxu0 0.0
          %608 = vmatpush1.msra.mxu0 0.0
          %609 = vmatprep.subr.mxu0 0.0
          %610 = vmatpush1.msra.mxu0 0.0
          %611 = vmatprep.subr.mxu0 0.0
          %612 = vmatpush1.msra.mxu0 0.0
          %613 = vmatprep.subr.mxu0 0.0
          %614 = vmatpush1.msra.mxu0 0.0
          %615 = vmatprep.subr.mxu0 0.0
          %616 = vmatpush1.msra.mxu0 0.0
          %617 = vmatprep.subr.mxu0 0.0
          %618 = vmatpush1.msra.mxu0 0.0
          %619 = vmatprep.subr.mxu0 0.0
          %620 = vmatpush1.msra.mxu0 0.0
          %621 = vmatprep.subr.mxu0 0.0
          %622 = vmatpush1.msra.mxu0 0.0
          %623 = vmatprep.subr.mxu0 0.0
          %624 = vmatpush1.msra.mxu0 0.0
          %625 = vmatprep.mubr.f32.mxu0 0.0
          %626 = vmatmul.mubr.f32.gmra.mrb[0].mxu0 %v559
          %v627 = vpop.f32.mrb[0].mxu0
          %v628 = vadd.f32 0.0, %v627
          %v629 = vpop.f32.mrb[0].mxu0
          %630 = vdwg.mxu0
          %v631 = vld [vmem:[#allocation2] sm:$0xff]
          %s632 = smul.u32 %s370, 8
          %s633 = scalar_lea.vmem [#allocation11], %s632
          %v634 = vld [vmem:[%s633] sm:$0xff]
          %v636 = vsel %vm468, %v628, 0
          %638 = vmatprep.subr.mxu0 0.0
          %639 = vmatpush1.msra.mxu0 %v634
          %640 = vmatprep.subr.mxu0 0.0
          %641 = vmatpush1.msra.mxu0 0.0
          %642 = vmatprep.subr.mxu0 0.0
          %643 = vmatpush1.msra.mxu0 0.0
          %644 = vmatprep.subr.mxu0 0.0
          %645 = vmatpush1.msra.mxu0 0.0
          %646 = vmatprep.subr.mxu0 0.0
          %647 = vmatpush1.msra.mxu0 0.0
          %648 = vmatprep.subr.mxu0 0.0
          %649 = vmatpush1.msra.mxu0 0.0
          %650 = vmatprep.subr.mxu0 0.0
          %651 = vmatpush1.msra.mxu0 0.0
          %652 = vmatprep.subr.mxu0 0.0
          %653 = vmatpush1.msra.mxu0 0.0
          %654 = vmatprep.subr.mxu0 0.0
          %655 = vmatpush1.msra.mxu0 0.0
          %656 = vmatprep.subr.mxu0 0.0
          %657 = vmatpush1.msra.mxu0 0.0
          %658 = vmatprep.subr.mxu0 0.0
          %659 = vmatpush1.msra.mxu0 0.0
          %660 = vmatprep.subr.mxu0 0.0
          %661 = vmatpush1.msra.mxu0 0.0
          %662 = vmatprep.subr.mxu0 0.0
          %663 = vmatpush1.msra.mxu0 0.0
          %664 = vmatprep.subr.mxu0 0.0
          %665 = vmatpush1.msra.mxu0 0.0
          %666 = vmatprep.subr.mxu0 0.0
          %667 = vmatpush1.msra.mxu0 0.0
          %668 = vmatprep.subr.mxu0 0.0
          %669 = vmatpush1.msra.mxu0 0.0
          %670 = vmatprep.subr.mxu0 0.0
          %671 = vmatpush1.msra.mxu0 0.0
          %672 = vmatprep.subr.mxu0 0.0
          %673 = vmatpush1.msra.mxu0 0.0
          %674 = vmatprep.subr.mxu0 0.0
          %675 = vmatpush1.msra.mxu0 0.0
          %676 = vmatprep.subr.mxu0 0.0
          %677 = vmatpush1.msra.mxu0 0.0
          %678 = vmatprep.subr.mxu0 0.0
          %679 = vmatpush1.msra.mxu0 0.0
          %680 = vmatprep.subr.mxu0 0.0
          %681 = vmatpush1.msra.mxu0 0.0
          %682 = vmatprep.subr.mxu0 0.0
          %683 = vmatpush1.msra.mxu0 0.0
          %684 = vmatprep.subr.mxu0 0.0
          %685 = vmatpush1.msra.mxu0 0.0
          %686 = vmatprep.subr.mxu0 0.0
          %687 = vmatpush1.msra.mxu0 0.0
          %688 = vmatprep.subr.mxu0 0.0
          %689 = vmatpush1.msra.mxu0 0.0
          %690 = vmatprep.subr.mxu0 0.0
          %691 = vmatpush1.msra.mxu0 0.0
          %692 = vmatprep.subr.mxu0 0.0
          %693 = vmatpush1.msra.mxu0 0.0
          %694 = vmatprep.subr.mxu0 0.0
          %695 = vmatpush1.msra.mxu0 0.0
          %696 = vmatprep.subr.mxu0 0.0
          %697 = vmatpush1.msra.mxu0 0.0
          %698 = vmatprep.subr.mxu0 0.0
          %699 = vmatpush1.msra.mxu0 0.0
          %700 = vmatprep.subr.mxu0 0.0
          %701 = vmatpush1.msra.mxu0 0.0
          %702 = vmatprep.mubr.f32.mxu0 0.0
          %703 = vmatmul.mubr.f32.gmra.mrb[0].mxu0 %v636
          %v704 = vpop.f32.mrb[0].mxu0
          %v705 = vadd.f32 0.0, %v704
          %v706 = vpop.f32.mrb[0].mxu0
          %707 = vdwg.mxu0
          %v708 = vadd.f32 %v631, %v705
          %709 = vst.msk [vmem:[#allocation2] sm:$0xff] %vm367, %v708
        $region73: #{tpu_custom_call.1} parent=43 // loop_footer
          %s374 = sadd.s32 1, %s370
        $region74: #{tpu_custom_call.1} parent=43 // loop_footer_branch
          %369 = sbr.rel target = $region70
        $region75: #{tpu_custom_call.1} parent=43 // loop_exit
          _
        %v710 = vld [vmem:[#allocation2] sm:$0xff]
        %711 = vst.msk [vmem:[%s359] sm:$0xff] %vm367, %v710
        %s712 = sand.u32 %s172, 1
        %s713 = scalar_lea.sflag [#allocation5], %s712
        %s714 = sand.u32 %s172, 1
        %s715 = smul.addr %s714, 8
        %s716 = scalar_lea.vmem [#allocation14], %s715
        // Predicated region
        $region76: #{tpu_custom_call.1} parent=43 // pred_check
          %p717 = pneg %p182
        $region77: #{tpu_custom_call.1} parent=43 // pred_check_branch
          %719 = sbr.rel (%p717) target = $region79
        $region78: #{tpu_custom_call.1} parent=43 // pred_region
          %s721 = ssub.s32 128, 128
          %722 = vsyncadd %s713, %s721
          %s723 = smul.addr %s28, 128
          %s724 = scalar_lea.hbm %s6, %s723
          %s726 = sshll.u32 %s716, 4
          %s727 = int_to_ptr.vmem [resolvable:$true] %s726
          %729 = dma.vmem_to_hbm [thread:$0]  %s727, 128, %s724, %s713
        $region79: #{tpu_custom_call.1} parent=43 // pred_fallthru
          _
      $region44: #{tpu_custom_call.1} parent=5 // pred_fallthru
        _
      %p730 = scmp.le.s32.totalorder 2, %s23
      // Predicated region
      $region80: #{tpu_custom_call.1} parent=5 // pred_check
        %p731 = pneg %p730
      $region81: #{tpu_custom_call.1} parent=5 // pred_check_branch
        %733 = sbr.rel (%p731) target = $region83
      $region82: #{tpu_custom_call.1} parent=5 // pred_region
        %s734 = ssub.s32 %s23, 2
        // Predicated region
        $region84: #{tpu_custom_call.1} parent=82 // pred_check
          %p735 = pneg %p188
        $region85: #{tpu_custom_call.1} parent=82 // pred_check_branch
          %737 = sbr.rel (%p735) target = $region87
        $region86: #{tpu_custom_call.1} parent=82 // pred_region
          %s738 = sand.u32 %s173, 1
          %s739 = scalar_lea.sflag [#allocation5], %s738
          %s740 = sand.u32 %s173, 1
          %s741 = smul.addr %s740, 8
          %s742 = scalar_lea.vmem [#allocation14], %s741
          %743 = dma.done %s739, 128
        $region87: #{tpu_custom_call.1} parent=82 // pred_fallthru
          _
      $region83: #{tpu_custom_call.1} parent=5 // pred_fallthru
        _
    $region6: #{tpu_custom_call.1} parent=1 // loop_footer
      %s27 = sadd.s32 1, %s23
    $region7: #{tpu_custom_call.1} parent=1 // loop_footer_branch
      %22 = sbr.rel target = $region3
    $region8: #{tpu_custom_call.1} parent=1 // loop_exit
      _
    %744 = vsyncpa [#allocation4], 1
    %s745 = scalar_lea.sflag [#allocation4], 1
    %746 = vsyncpa %s745, 1
    %747 = vsyncpa [#allocation7], 1
    %s748 = scalar_lea.sflag [#allocation7], 1
    %749 = vsyncpa %s748, 1
    %750 = vsyncpa [#allocation10], 1
    %751 = vsyncpa [#allocation13], 1
    %752 = vsyncpa [#allocation5], 1
    %s753 = scalar_lea.sflag [#allocation5], 1
    %754 = vsyncpa %s753, 1

</llo_original>
